<compile_context>
chip_gen: v7x
topology: tpu7x:2x2x1
jax: 0.10.0
libtpu: 0.0.40
codegen_flags: <defaults>
</compile_context>

<pallas_src>
import jax
import jax.numpy as jnp
from jax.experimental import pallas as pl
from jax.experimental.pallas import tpu as pltpu

K = 3          # MaxPool2d(3): kernel_size = stride = 3
KK = K * K


def _maxpool_tap_kernel(x_ref, o_ref):
    # x_ref: (K*K, TILE_NC, TILE_HW)   o_ref: (TILE_NC, TILE_HW)
    # Each tap x_ref[t] is a contiguous, (8,128)-aligned slab (leading-axis index);
    # reduce the 9 taps with a pairwise tree (VALU dep chain 4 instead of 8).
    taps = [x_ref[t] for t in range(KK)]
    while len(taps) > 1:
        nxt = [jnp.maximum(taps[i], taps[i + 1]) for i in range(0, len(taps) - 1, 2)]
        if len(taps) % 2:
            nxt.append(taps[-1])
        taps = nxt
    o_ref[...] = taps[0]


def _pick_tile(dim, unit, candidates):
    """Largest candidate tile (a multiple of `unit`) that evenly divides `dim`,
    else the full extent (full-extent blocks are always legal)."""
    if dim % unit == 0:
        for c in candidates:
            if c <= dim and dim % c == 0:
                return c
    return dim


def _pad_value(dtype):
    if jnp.issubdtype(dtype, jnp.floating):
        return -jnp.inf
    if dtype == jnp.bool_:
        return False
    return jnp.iinfo(dtype).min


def maxpool2d_ceil(x):
    """MaxPool2d(kernel_size=3, stride=3, padding=0, ceil_mode=True) on NCHW input."""
    N, C, H, W = x.shape
    # ceil_mode output size (stride == kernel, no padding): ceil((H - K)/K) + 1.
    H_out = -(-(H - K) // K) + 1
    W_out = -(-(W - K) // K) + 1
    H_pad, W_pad = H_out * K, W_out * K

    # With stride == kernel_size and ceil_mode, every window starts inside the original
    # extent, so the pad value never dominates a window -> matches PyTorch semantics.
    if H_pad != H or W_pad != W:
        xp = jnp.pad(
            x,
            ((0, 0), (0, 0), (0, H_pad - H), (0, W_pad - W)),
            constant_values=_pad_value(x.dtype),
        )
    else:
        xp = x

    NC = N * C
    HW = H_out * W_out
    # Single layout pass: (N,C,Hp,Wp) -> (KK, NC, H_out*W_out). Taps leading, flattened
    # output positions on lanes (lane-dense). dtype is preserved end-to-end (bf16 stays
    # bf16 -> half the HBM traffic of an f32 upcast).
    xt = xp.reshape(NC, H_out, K, W_out, K)
    xt = jnp.transpose(xt, (2, 4, 0, 1, 3)).reshape(KK, NC, HW)

    # Block shape: last two dims must be multiples of (8, 128) or the full extent.
    # Worst-case tile here (64 x 2048 f32) gives ~10.5 MiB of double-buffered VMEM
    # (9x input + 1x output), safely inside every generation's scoped limit
    # (v5e raised to 32 MiB below; v6e/v7x default 32 MiB; v7x physical 64 MiB).
    tile_hw = _pick_tile(HW, 128, (2048, 1024, 512, 384, 256, 128))
    tile_nc = _pick_tile(NC, 8, (64, 32, 16, 8))
    grid = (NC // tile_nc, HW // tile_hw)

    out = pl.pallas_call(
        _maxpool_tap_kernel,
        out_shape=jax.ShapeDtypeStruct((NC, HW), x.dtype),
        grid=grid,
        in_specs=[
            pl.BlockSpec((KK, tile_nc, tile_hw), lambda i, j: (0, i, j)),
        ],
        out_specs=pl.BlockSpec((tile_nc, tile_hw), lambda i, j: (i, j)),
        compiler_params=pltpu.CompilerParams(
            # Both grid axes write independent output blocks -> shardable across the
            # two TensorCores on v7x; harmless on single-TC v5e/v6e.
            dimension_semantics=("parallel", "parallel"),
            vmem_limit_bytes=32 * 1024 * 1024,
        ),
    )(xt)

    # (NC, H_out*W_out) -> (N, C, H_out, W_out): pure reshape, no transpose pass.
    return out.reshape(N, C, H_out, W_out)


def _reference_maxpool(x):
    """Pure-JAX reference with identical semantics (sanity check)."""
    N, C, H, W = x.shape
    H_out = -(-(H - K) // K) + 1
    W_out = -(-(W - K) // K) + 1
    xp = jnp.pad(
        x,
        ((0, 0), (0, 0), (0, H_out * K - H), (0, W_out * K - W)),
        constant_values=_pad_value(x.dtype),
    )
    xr = xp.reshape(N, C, H_out, K, W_out, K)
    return jnp.max(xr, axis=(3, 5))


if __name__ == "__main__":
    key = jax.random.PRNGKey(0)

    # Shape implied by the module spec: (N=2, C=4, H=W=16) -> output (2, 4, 6, 6).
    x = jax.random.normal(key, (2, 4, 16, 16), dtype=jnp.float32)
    y = jax.block_until_ready(maxpool2d_ceil(x))
    y_ref = _reference_maxpool(x)
    assert y.shape == (2, 4, 6, 6), y.shape
    assert jnp.array_equal(y, y_ref), "mismatch vs reference (f32)"

    # bf16 end-to-end + a shape that exercises a multi-block grid and the no-pad path.
    xb = jax.random.normal(jax.random.PRNGKey(1), (4, 32, 18, 18), dtype=jnp.bfloat16)
    yb = jax.block_until_ready(maxpool2d_ceil(xb))
    assert yb.dtype == jnp.bfloat16 and yb.shape == (4, 32, 6, 6)
    assert jnp.array_equal(yb, _reference_maxpool(xb)), "mismatch vs reference (bf16)"

    print("KERNEL_OK")
</pallas_src>

<mosaic_0001>
module attributes {stable_mosaic.version = 11 : i64} {
  func.func @_maxpool_tap_kernel(%arg0: i32, %arg1: i32, %arg2: memref<9x8x36xf32, #tpu.memory_space<vmem>>, %arg3: memref<8x36xf32, #tpu.memory_space<vmem>>) attributes {dimension_semantics = [#tpu.dimension_semantics<parallel>, #tpu.dimension_semantics<parallel>], iteration_bounds = array<i64: 1, 1>, scalar_prefetch = 0 : i64, scratch_operands = 0 : i64, tpu.core_type = #tpu.core_type<tc>, window_params = [{transform_indices = @transform_0, window_bounds = array<i64: 9, 8, 36>}, {transform_indices = @transform_1, window_bounds = array<i64: 8, 36>}]} {
    %c0 = arith.constant 0 : index
    %c0_0 = arith.constant 0 : index
    %c0_1 = arith.constant 0 : index
    %0 = vector.load %arg2[%c0, %c0_0, %c0_1] : memref<9x8x36xf32, #tpu.memory_space<vmem>>, vector<1x8x36xf32>
    %1 = vector.shape_cast %0 : vector<1x8x36xf32> to vector<8x36xf32>
    %c1 = arith.constant 1 : index
    %c0_2 = arith.constant 0 : index
    %c0_3 = arith.constant 0 : index
    %2 = vector.load %arg2[%c1, %c0_2, %c0_3] : memref<9x8x36xf32, #tpu.memory_space<vmem>>, vector<1x8x36xf32>
    %3 = vector.shape_cast %2 : vector<1x8x36xf32> to vector<8x36xf32>
    %c2 = arith.constant 2 : index
    %c0_4 = arith.constant 0 : index
    %c0_5 = arith.constant 0 : index
    %4 = vector.load %arg2[%c2, %c0_4, %c0_5] : memref<9x8x36xf32, #tpu.memory_space<vmem>>, vector<1x8x36xf32>
    %5 = vector.shape_cast %4 : vector<1x8x36xf32> to vector<8x36xf32>
    %c3 = arith.constant 3 : index
    %c0_6 = arith.constant 0 : index
    %c0_7 = arith.constant 0 : index
    %6 = vector.load %arg2[%c3, %c0_6, %c0_7] : memref<9x8x36xf32, #tpu.memory_space<vmem>>, vector<1x8x36xf32>
    %7 = vector.shape_cast %6 : vector<1x8x36xf32> to vector<8x36xf32>
    %c4 = arith.constant 4 : index
    %c0_8 = arith.constant 0 : index
    %c0_9 = arith.constant 0 : index
    %8 = vector.load %arg2[%c4, %c0_8, %c0_9] : memref<9x8x36xf32, #tpu.memory_space<vmem>>, vector<1x8x36xf32>
    %9 = vector.shape_cast %8 : vector<1x8x36xf32> to vector<8x36xf32>
    %c5 = arith.constant 5 : index
    %c0_10 = arith.constant 0 : index
    %c0_11 = arith.constant 0 : index
    %10 = vector.load %arg2[%c5, %c0_10, %c0_11] : memref<9x8x36xf32, #tpu.memory_space<vmem>>, vector<1x8x36xf32>
    %11 = vector.shape_cast %10 : vector<1x8x36xf32> to vector<8x36xf32>
    %c6 = arith.constant 6 : index
    %c0_12 = arith.constant 0 : index
    %c0_13 = arith.constant 0 : index
    %12 = vector.load %arg2[%c6, %c0_12, %c0_13] : memref<9x8x36xf32, #tpu.memory_space<vmem>>, vector<1x8x36xf32>
    %13 = vector.shape_cast %12 : vector<1x8x36xf32> to vector<8x36xf32>
    %c7 = arith.constant 7 : index
    %c0_14 = arith.constant 0 : index
    %c0_15 = arith.constant 0 : index
    %14 = vector.load %arg2[%c7, %c0_14, %c0_15] : memref<9x8x36xf32, #tpu.memory_space<vmem>>, vector<1x8x36xf32>
    %15 = vector.shape_cast %14 : vector<1x8x36xf32> to vector<8x36xf32>
    %c8 = arith.constant 8 : index
    %c0_16 = arith.constant 0 : index
    %c0_17 = arith.constant 0 : index
    %16 = vector.load %arg2[%c8, %c0_16, %c0_17] : memref<9x8x36xf32, #tpu.memory_space<vmem>>, vector<1x8x36xf32>
    %17 = vector.shape_cast %16 : vector<1x8x36xf32> to vector<8x36xf32>
    %18 = arith.maximumf %1, %3 : vector<8x36xf32>
    %19 = arith.maximumf %5, %7 : vector<8x36xf32>
    %20 = arith.maximumf %9, %11 : vector<8x36xf32>
    %21 = arith.maximumf %13, %15 : vector<8x36xf32>
    %22 = arith.maximumf %18, %19 : vector<8x36xf32>
    %23 = arith.maximumf %20, %21 : vector<8x36xf32>
    %24 = arith.maximumf %22, %23 : vector<8x36xf32>
    %25 = arith.maximumf %24, %17 : vector<8x36xf32>
    %c0_18 = arith.constant 0 : index
    %c0_19 = arith.constant 0 : index
    %26 = vector.load %arg3[%c0_18, %c0_19] : memref<8x36xf32, #tpu.memory_space<vmem>>, vector<8x36xf32>
    tpu.vector_store %arg3[%c0_18, %c0_19], %25 {strides = array<i32>} : memref<8x36xf32, #tpu.memory_space<vmem>>, vector<8x36xf32>,
    return
  }
  func.func @transform_0(%arg0: i32, %arg1: i32) -> (i32, i32, i32) {
    %c0_i32 = arith.constant 0 : i32
    %c0_i32_0 = arith.constant 0 : i32
    return %c0_i32, %arg0, %arg1 : i32, i32, i32
  }
  func.func @transform_1(%arg0: i32, %arg1: i32) -> (i32, i32) {
    %c0_i32 = arith.constant 0 : i32
    return %arg0, %arg1 : i32, i32
  }
}

</mosaic_0001>

<llo_original>
// kernel: tpu_custom_call.1
$region0: #{tpu_custom_call.1}
  #allocation0 [shape = 'u32[]', space=smem, size = 0x4, offset = 0x4, fixed_abs, tag = 'smem constant byte address 0x4 - core index']
  #allocation1 [shape = 'u32[144,128]{1,0:T(1,128)}', space=vmem, size = 0x12000, scoped, tag = 'internal scratch']
  %s0 = inlined_call_operand.hbm [shape: f32[9,8,36], index: 0, kind: input, shape index: {}]
  %s1 = inlined_call_operand.hbm [shape: f32[8,36], index: 1, kind: output, shape index: {}]
  %s2 = sld [smem:[#allocation0]]
  $region18: #{tpu_custom_call.1} parent=0
    _
  %s4 = ssub.s32 1, %s2
  %s5 = scalar_select 0, %s4, %s2
  $region1: #{tpu_custom_call.1} parent=0
    #allocation2 [shape = 'u8[36864]{0}', space=vmem, size = 0x9000, scoped, tag = 'input window, operand 0, single buffered']
    #allocation3 [shape = 's32[1]{0}', space=sflag, size = 0x4, scoped, tag = 'scoped memory for tpu_custom_call.1']
    #allocation4 [shape = 's32[1]{0}', space=sflag, size = 0x4, scoped, tag = 'scoped memory for tpu_custom_call.1']
    #allocation5 [shape = 'u8[4096]{0}', space=vmem, size = 0x1000, scoped, tag = 'output window, operand 0, single buffered']
    %6 = vsyncpa [#allocation3], 0
    %7 = vsyncpa [#allocation4], 0
    // Predicated region
    $region2: #{tpu_custom_call.1} parent=1 // pred_check
      _
    $region3: #{tpu_custom_call.1} parent=1 // pred_check_branch
      %9 = sbr.rel (0) target = $region5
    $region4: #{tpu_custom_call.1} parent=1 // pred_region
      %s11 = ssub.s32 1152, 1152
      %12 = vsyncadd [#allocation3], %s11
      %s13 = sshll.u32 [#allocation2], 4
      %s14 = int_to_ptr.vmem [resolvable:$true] %s13
      %19 = dma.hbm_to_vmem [thread:$0]  %s0, 1152, %s14, [#allocation3], 128, 128, 8
    $region5: #{tpu_custom_call.1} parent=1 // pred_fallthru
      _
    // Predicated region
    $region6: #{tpu_custom_call.1} parent=1 // pred_check
      _
    $region7: #{tpu_custom_call.1} parent=1 // pred_check_branch
      %21 = sbr.rel (0) target = $region9
    $region8: #{tpu_custom_call.1} parent=1 // pred_region
      %22 = dma.done [#allocation3], 1152
    $region9: #{tpu_custom_call.1} parent=1 // pred_fallthru
      _
    %v23 = vld [vmem:[#allocation2] sm:$0xff]
    %s24 = scalar_lea.vmem [#allocation2], 8
    %v25 = vld [vmem:[%s24] sm:$0xff]
    %s26 = scalar_lea.vmem [#allocation2], 16
    %v27 = vld [vmem:[%s26] sm:$0xff]
    %s28 = scalar_lea.vmem [#allocation2], 24
    %v29 = vld [vmem:[%s28] sm:$0xff]
    %s30 = scalar_lea.vmem [#allocation2], 32
    %v31 = vld [vmem:[%s30] sm:$0xff]
    %s32 = scalar_lea.vmem [#allocation2], 40
    %v33 = vld [vmem:[%s32] sm:$0xff]
    %s34 = scalar_lea.vmem [#allocation2], 48
    %v35 = vld [vmem:[%s34] sm:$0xff]
    %s36 = scalar_lea.vmem [#allocation2], 56
    %v37 = vld [vmem:[%s36] sm:$0xff]
    %s38 = scalar_lea.vmem [#allocation2], 64
    %v39 = vld [vmem:[%s38] sm:$0xff]
    %v40 = vmax.f32 %v23, %v25
    %v41 = vmax.f32 %v27, %v29
    %v42 = vmax.f32 %v31, %v33
    %v43 = vmax.f32 %v35, %v37
    %v44 = vmax.f32 %v40, %v41
    %v45 = vmax.f32 %v42, %v43
    %v46 = vmax.f32 %v44, %v45
    %v47 = vmax.f32 %v46, %v39
    %vm48 = vcmask 293888
    %49 = vst.msk [vmem:[#allocation5] sm:$0xff] %vm48, %v47
    // Predicated region
    $region10: #{tpu_custom_call.1} parent=1 // pred_check
      _
    $region11: #{tpu_custom_call.1} parent=1 // pred_check_branch
      %51 = sbr.rel (0) target = $region13
    $region12: #{tpu_custom_call.1} parent=1 // pred_region
      %s53 = ssub.s32 128, 128
      %54 = vsyncadd [#allocation4], %s53
      %s56 = sshll.u32 [#allocation5], 4
      %s57 = int_to_ptr.vmem [resolvable:$true] %s56
      %59 = dma.vmem_to_hbm [thread:$0]  %s57, 128, %s1, [#allocation4]
    $region13: #{tpu_custom_call.1} parent=1 // pred_fallthru
      _
    // Predicated region
    $region14: #{tpu_custom_call.1} parent=1 // pred_check
      _
    $region15: #{tpu_custom_call.1} parent=1 // pred_check_branch
      %61 = sbr.rel (0) target = $region17
    $region16: #{tpu_custom_call.1} parent=1 // pred_region
      %62 = dma.done [#allocation4], 128
    $region17: #{tpu_custom_call.1} parent=1 // pred_fallthru
      _
    %63 = vsyncpa [#allocation3], 1
    %64 = vsyncpa [#allocation4], 1

</llo_original>
